<compile_context>
chip_gen: v5e
topology: v5e:2x2
jax: 0.10.0
libtpu: 0.0.40
codegen_flags: <defaults>
</compile_context>

<pallas_src>
import functools

import jax
import jax.numpy as jnp
import numpy as np
from jax.experimental import pallas as pl
from jax.experimental.pallas import tpu as pltpu


def _nse_kernel(boundary_ref, flow_ref, loss_ref, flow_bc_ref, eq_mask_ref,
                *, h, nu, H, W):
    Hp, Wp = boundary_ref.shape
    inv_h = 1.0 / h
    nu_inv_h2 = nu / (h * h)
    inv_n = 1.0 / float(H * W)

    b = boundary_ref[...]          # (Hp, Wp) boundary ids (padding cells carry -1)
    u0 = flow_ref[0]
    v0 = flow_ref[1]
    p0 = flow_ref[2]

    # ---- set_bc: bc2 -> u=v=p=0 ; bc1 -> u=3, v=0 ; bc3 -> p=0
    is1 = b == 1.0
    is2 = b == 2.0
    is3 = b == 3.0
    u_bc = jnp.where(is2, 0.0, jnp.where(is1, 3.0, u0))
    v_bc = jnp.where(is1 | is2, 0.0, v0)
    p_bc = jnp.where(is2 | is3, 0.0, p0)
    flow_bc_ref[0] = u_bc
    flow_bc_ref[1] = v_bc
    flow_bc_ref[2] = p_bc

    # ---- per-case selectors (each compare issued exactly once, then reused)
    is4, is5, is6, is7 = b == 4.0, b == 5.0, b == 6.0, b == 7.0
    is8, is9, is10, is11 = b == 8.0, b == 9.0, b == 10.0, b == 11.0
    fdx_sel = is4 | is8 | is11
    bdx_sel = is6 | is9 | is10
    fdy_sel = is7 | is10 | is11
    bdy_sel = is5 | is8 | is9
    # union of eq_num in [0, 4..11]; padded cells (b == -1) are excluded
    eq_sel = (b == 0.0) | ((b >= 4.0) & (b <= 11.0))
    eq_mask_ref[...] = jnp.where(eq_sel, b, 0.0)

    # ---- reflect-pad edge masks (computed once, shared by u / v / p)
    col = jax.lax.broadcasted_iota(jnp.int32, (Hp, Wp), 1)
    row = jax.lax.broadcasted_iota(jnp.int32, (Hp, Wp), 0)
    col_first = col == 0
    col_last = col == W - 1
    row_first = row == 0
    row_last = row == H - 1

    def neighbors(x):
        # Wrap-around shifts on the XLU, then fix the reflect-pad edges.
        l_roll = pltpu.roll(x, 1, 1)         # x[i, j-1] (wraps at j=0)
        r_roll = pltpu.roll(x, Wp - 1, 1)    # x[i, j+1] (wraps at j=Wp-1)
        u_roll = pltpu.roll(x, 1, 0)         # x[i-1, j] (wraps at i=0)
        d_roll = pltpu.roll(x, Hp - 1, 0)    # x[i+1, j] (wraps at i=Hp-1)
        left = jnp.where(col_first, r_roll, l_roll)    # reflect: (i,0)   -> x[i,1]
        right = jnp.where(col_last, l_roll, r_roll)    # reflect: (i,W-1) -> x[i,W-2]
        up = jnp.where(row_first, d_roll, u_roll)      # reflect: (0,j)   -> x[1,j]
        down = jnp.where(row_last, u_roll, d_roll)     # reflect: (H-1,j) -> x[H-2,j]
        return left, right, up, down

    # ---- pressure block first (its neighbors die before u/v stencils start)
    pL, pR, pU, pD = neighbors(p_bc)
    dpx = jnp.where(fdx_sel, pR - p_bc,
                    jnp.where(bdx_sel, p_bc - pL, 0.5 * (pR - pL)))
    dpy = jnp.where(fdy_sel, pU - p_bc,
                    jnp.where(bdy_sel, p_bc - pD, 0.5 * (pD - pU)))

    # ---- u block
    uL, uR, uU, uD = neighbors(u_bc)
    dx_u = 0.5 * (uR - uL)
    dy_u = 0.5 * (uD - uU)
    lap_u = uL + uR + uU + uD - 4.0 * u_bc
    mom_u = inv_h * (u_bc * dx_u + v_bc * dy_u + dpx) - nu_inv_h2 * lap_u
    sq = mom_u * mom_u

    # ---- v block
    vL, vR, vU, vD = neighbors(v_bc)
    dx_v = 0.5 * (vR - vL)
    dy_v = 0.5 * (vD - vU)
    lap_v = vL + vR + vU + vD - 4.0 * v_bc
    mom_v = inv_h * (u_bc * dx_v + v_bc * dy_v + dpy) - nu_inv_h2 * lap_v
    sq = sq + mom_v * mom_v
    cont = inv_h * (dx_u + dy_v)
    sq = sq + cont * cont

    # ---- fused masked MSE: (sum lu^2 + sum lv^2 + sum ld^2) / (H*W)
    # eq mask is {0,1}, so mask*(mu^2+mv^2+c^2) == (m*mu)^2+(m*mv)^2+(m*c)^2.
    loss_ref[0, 0] = jnp.sum(jnp.where(eq_sel, sq, 0.0)) * inv_n


def nse_layer_forward(layout, flow, *, nx, ny, length_x=6.0, nu=5 * 0.01):
    """Pallas implementation of NSE_layer.forward -> (loss_nse, flow_bc, eq_mask)."""
    del ny  # only h = length_x / nx is used by the forward pass
    h = float(length_x) / float(nx)
    boundary = layout[0, 1].astype(jnp.float32)   # (H, W)
    flow3 = flow[0].astype(jnp.float32)           # (3, H, W)
    H, W = boundary.shape

    # Pad to (8, 128)-aligned planes so vregs are lane-dense and rolls/stores
    # are unmasked.  Padded boundary id -1 keeps padding out of every case.
    Hp = -(-H // 8) * 8
    Wp = -(-W // 128) * 128
    if (Hp, Wp) != (H, W):
        boundary_p = jnp.pad(boundary, ((0, Hp - H), (0, Wp - W)),
                             constant_values=-1.0)
        flow_p = jnp.pad(flow3, ((0, 0), (0, Hp - H), (0, Wp - W)))
    else:
        boundary_p, flow_p = boundary, flow3

    kernel = functools.partial(_nse_kernel, h=h, nu=float(nu), H=H, W=W)
    loss, flow_bc_p, eq_mask_p = pl.pallas_call(
        kernel,
        out_shape=(
            jax.ShapeDtypeStruct((1, 1), jnp.float32),        # scalar loss
            jax.ShapeDtypeStruct((3, Hp, Wp), jnp.float32),   # flow_bc (padded)
            jax.ShapeDtypeStruct((Hp, Wp), jnp.float32),      # eq_mask (padded)
        ),
        in_specs=[
            pl.BlockSpec(memory_space=pltpu.MemorySpace.VMEM),
            pl.BlockSpec(memory_space=pltpu.MemorySpace.VMEM),
        ],
        out_specs=(
            pl.BlockSpec(memory_space=pltpu.MemorySpace.SMEM),
            pl.BlockSpec(memory_space=pltpu.MemorySpace.VMEM),
            pl.BlockSpec(memory_space=pltpu.MemorySpace.VMEM),
        ),
        compiler_params=pltpu.CompilerParams(
            vmem_limit_bytes=32 * 1024 * 1024),
    )(boundary_p, flow_p)

    flow_bc = flow_bc_p[:, :H, :W][None]          # (1, 3, H, W)
    eq_mask = eq_mask_p[:H, :W]                   # (H, W)
    return loss[0, 0], flow_bc, eq_mask


def _ref_forward(layout, flow, *, nx, ny, length_x=6.0, nu=5 * 0.01):
    """Pure-JAX reference mirroring the PyTorch module (for validation)."""
    del ny
    h = float(length_x) / float(nx)
    layout = layout.astype(jnp.float32)
    flow = flow.astype(jnp.float32)
    b = layout[0, 1]
    u0, v0, p0 = flow[0, 0], flow[0, 1], flow[0, 2]
    is1, is2, is3 = b == 1.0, b == 2.0, b == 3.0
    u_bc = jnp.where(is2, 0.0, jnp.where(is1, 3.0, u0))
    v_bc = jnp.where(is1 | is2, 0.0, v0)
    p_bc = jnp.where(is2 | is3, 0.0, p0)

    def nb(x):
        xp = jnp.pad(x, 1, mode="reflect")
        return xp[1:-1, :-2], xp[1:-1, 2:], xp[:-2, 1:-1], xp[2:, 1:-1]

    uL, uR, uU, uD = nb(u_bc)
    vL, vR, vU, vD = nb(v_bc)
    pL, pR, pU, pD = nb(p_bc)

    dx_u, dy_u = 0.5 * (uR - uL), 0.5 * (uD - uU)
    lap_u = uL + uR + uU + uD - 4.0 * u_bc
    dx_v, dy_v = 0.5 * (vR - vL), 0.5 * (vD - vU)
    lap_v = vL + vR + vU + vD - 4.0 * v_bc
    dx_p, dy_p = 0.5 * (pR - pL), 0.5 * (pD - pU)
    fdx_p, bdx_p = pR - p_bc, p_bc - pL
    fdy_p, bdy_p = pU - p_bc, p_bc - pD

    dpx = jnp.where((b == 4.0) | (b == 8.0) | (b == 11.0), fdx_p,
                    jnp.where((b == 6.0) | (b == 9.0) | (b == 10.0), bdx_p, dx_p))
    dpy = jnp.where((b == 7.0) | (b == 10.0) | (b == 11.0), fdy_p,
                    jnp.where((b == 5.0) | (b == 8.0) | (b == 9.0), bdy_p, dy_p))

    eq_sel = b == 0.0
    for e in (4.0, 5.0, 6.0, 7.0, 8.0, 9.0, 10.0, 11.0):
        eq_sel = eq_sel | (b == e)
    eq_m = eq_sel.astype(jnp.float32)
    eq_mask = jnp.where(eq_sel, b, 0.0)

    mom_u = u_bc * dx_u / h + v_bc * dy_u / h + dpx / h - nu * lap_u / h / h
    mom_v = u_bc * dx_v / h + v_bc * dy_v / h + dpy / h - nu * lap_v / h / h
    cont = dx_u / h + dy_v / h
    lu, lv, ld = eq_m * mom_u, eq_m * mom_v, eq_m * cont
    loss = jnp.mean(lu * lu) + jnp.mean(lv * lv) + jnp.mean(ld * ld)
    flow_bc = jnp.stack([u_bc, v_bc, p_bc], axis=0)[None]
    return loss, flow_bc, eq_mask


def _run_case(key, H, W):
    k1, k2, k3 = jax.random.split(key, 3)
    geom = jax.random.normal(k1, (1, 1, H, W), jnp.float32)
    boundary = jax.random.randint(k2, (1, 1, H, W), 0, 12).astype(jnp.float32)
    layout = jnp.concatenate([geom, boundary], axis=1)       # (1, 2, H, W), NCHW
    flow = jax.random.normal(k3, (1, 3, H, W), jnp.float32)  # (1, 3, H, W), NCHW

    loss, flow_bc, eq_mask = nse_layer_forward(layout, flow, nx=W, ny=H)
    jax.block_until_ready((loss, flow_bc, eq_mask))

    ref_loss, ref_flow_bc, ref_eq_mask = _ref_forward(layout, flow, nx=W, ny=H)
    assert np.allclose(np.asarray(loss), np.asarray(ref_loss),
                       rtol=1e-3, atol=1e-3), (float(loss), float(ref_loss))
    assert np.allclose(np.asarray(flow_bc), np.asarray(ref_flow_bc),
                       rtol=1e-5, atol=1e-6)
    assert np.array_equal(np.asarray(eq_mask), np.asarray(ref_eq_mask))


if __name__ == "__main__":
    key = jax.random.PRNGKey(0)
    k_a, k_b = jax.random.split(key)
    # lane-dense case (W multiple of 128, H multiple of 8) — no wrapper padding
    _run_case(k_a, H=16, W=128)
    # unaligned case exercising the wrapper-side (8, 128) padding path
    _run_case(k_b, H=12, W=40)
    print("KERNEL_OK")
</pallas_src>

<mosaic_0001>
module attributes {stable_mosaic.version = 11 : i64} {
  func.func @_nse_kernel(%arg0: memref<16x128xf32, #tpu.memory_space<vmem>>, %arg1: memref<3x16x128xf32, #tpu.memory_space<vmem>>, %arg2: memref<1x1xf32, #tpu.memory_space<smem>>, %arg3: memref<3x16x128xf32, #tpu.memory_space<vmem>>, %arg4: memref<16x128xf32, #tpu.memory_space<vmem>>) attributes {dimension_semantics = [], scalar_prefetch = 0 : i64, scratch_operands = 0 : i64, tpu.core_type = #tpu.core_type<tc>} {
    %c0 = arith.constant 0 : index
    %c0_0 = arith.constant 0 : index
    %0 = vector.load %arg0[%c0, %c0_0] : memref<16x128xf32, #tpu.memory_space<vmem>>, vector<16x128xf32>
    %c0_1 = arith.constant 0 : index
    %c0_2 = arith.constant 0 : index
    %c0_3 = arith.constant 0 : index
    %1 = vector.load %arg1[%c0_1, %c0_2, %c0_3] : memref<3x16x128xf32, #tpu.memory_space<vmem>>, vector<1x16x128xf32>
    %2 = vector.shape_cast %1 : vector<1x16x128xf32> to vector<16x128xf32>
    %c1 = arith.constant 1 : index
    %c0_4 = arith.constant 0 : index
    %c0_5 = arith.constant 0 : index
    %3 = vector.load %arg1[%c1, %c0_4, %c0_5] : memref<3x16x128xf32, #tpu.memory_space<vmem>>, vector<1x16x128xf32>
    %4 = vector.shape_cast %3 : vector<1x16x128xf32> to vector<16x128xf32>
    %c2 = arith.constant 2 : index
    %c0_6 = arith.constant 0 : index
    %c0_7 = arith.constant 0 : index
    %5 = vector.load %arg1[%c2, %c0_6, %c0_7] : memref<3x16x128xf32, #tpu.memory_space<vmem>>, vector<1x16x128xf32>
    %6 = vector.shape_cast %5 : vector<1x16x128xf32> to vector<16x128xf32>
    %cst = arith.constant 1.000000e+00 : f32
    %7 = vector.broadcast %cst : f32 to vector<16x128xf32>
    %8 = arith.cmpf oeq, %0, %7 : vector<16x128xf32>
    %cst_8 = arith.constant 2.000000e+00 : f32
    %9 = vector.broadcast %cst_8 : f32 to vector<16x128xf32>
    %10 = arith.cmpf oeq, %0, %9 : vector<16x128xf32>
    %cst_9 = arith.constant 3.000000e+00 : f32
    %11 = vector.broadcast %cst_9 : f32 to vector<16x128xf32>
    %12 = arith.cmpf oeq, %0, %11 : vector<16x128xf32>
    %cst_10 = arith.constant 3.000000e+00 : f32
    %13 = vector.broadcast %cst_10 : f32 to vector<16x128xf32>
    %14 = arith.select %8, %13, %2 : vector<16x128xi1>, vector<16x128xf32>
    %cst_11 = arith.constant 0.000000e+00 : f32
    %15 = vector.broadcast %cst_11 : f32 to vector<16x128xf32>
    %16 = arith.select %10, %15, %14 : vector<16x128xi1>, vector<16x128xf32>
    %17 = arith.ori %8, %10 : vector<16x128xi1>
    %cst_12 = arith.constant 0.000000e+00 : f32
    %18 = vector.broadcast %cst_12 : f32 to vector<16x128xf32>
    %19 = arith.select %17, %18, %4 : vector<16x128xi1>, vector<16x128xf32>
    %20 = arith.ori %10, %12 : vector<16x128xi1>
    %cst_13 = arith.constant 0.000000e+00 : f32
    %21 = vector.broadcast %cst_13 : f32 to vector<16x128xf32>
    %22 = arith.select %20, %21, %6 : vector<16x128xi1>, vector<16x128xf32>
    %c0_14 = arith.constant 0 : index
    %c0_15 = arith.constant 0 : index
    %c0_16 = arith.constant 0 : index
    %23 = vector.load %arg3[%c0_14, %c0_15, %c0_16] : memref<3x16x128xf32, #tpu.memory_space<vmem>>, vector<1x16x128xf32>
    %24 = vector.shape_cast %23 : vector<1x16x128xf32> to vector<16x128xf32>
    %25 = vector.shape_cast %16 : vector<16x128xf32> to vector<1x16x128xf32>
    tpu.vector_store %arg3[%c0_14, %c0_15, %c0_16], %25 {strides = array<i32>} : memref<3x16x128xf32, #tpu.memory_space<vmem>>, vector<1x16x128xf32>,
    %c1_17 = arith.constant 1 : index
    %c0_18 = arith.constant 0 : index
    %c0_19 = arith.constant 0 : index
    %26 = vector.load %arg3[%c1_17, %c0_18, %c0_19] : memref<3x16x128xf32, #tpu.memory_space<vmem>>, vector<1x16x128xf32>
    %27 = vector.shape_cast %26 : vector<1x16x128xf32> to vector<16x128xf32>
    %28 = vector.shape_cast %19 : vector<16x128xf32> to vector<1x16x128xf32>
    tpu.vector_store %arg3[%c1_17, %c0_18, %c0_19], %28 {strides = array<i32>} : memref<3x16x128xf32, #tpu.memory_space<vmem>>, vector<1x16x128xf32>,
    %c2_20 = arith.constant 2 : index
    %c0_21 = arith.constant 0 : index
    %c0_22 = arith.constant 0 : index
    %29 = vector.load %arg3[%c2_20, %c0_21, %c0_22] : memref<3x16x128xf32, #tpu.memory_space<vmem>>, vector<1x16x128xf32>
    %30 = vector.shape_cast %29 : vector<1x16x128xf32> to vector<16x128xf32>
    %31 = vector.shape_cast %22 : vector<16x128xf32> to vector<1x16x128xf32>
    tpu.vector_store %arg3[%c2_20, %c0_21, %c0_22], %31 {strides = array<i32>} : memref<3x16x128xf32, #tpu.memory_space<vmem>>, vector<1x16x128xf32>,
    %cst_23 = arith.constant 4.000000e+00 : f32
    %32 = vector.broadcast %cst_23 : f32 to vector<16x128xf32>
    %33 = arith.cmpf oeq, %0, %32 : vector<16x128xf32>
    %cst_24 = arith.constant 5.000000e+00 : f32
    %34 = vector.broadcast %cst_24 : f32 to vector<16x128xf32>
    %35 = arith.cmpf oeq, %0, %34 : vector<16x128xf32>
    %cst_25 = arith.constant 6.000000e+00 : f32
    %36 = vector.broadcast %cst_25 : f32 to vector<16x128xf32>
    %37 = arith.cmpf oeq, %0, %36 : vector<16x128xf32>
    %cst_26 = arith.constant 7.000000e+00 : f32
    %38 = vector.broadcast %cst_26 : f32 to vector<16x128xf32>
    %39 = arith.cmpf oeq, %0, %38 : vector<16x128xf32>
    %cst_27 = arith.constant 8.000000e+00 : f32
    %40 = vector.broadcast %cst_27 : f32 to vector<16x128xf32>
    %41 = arith.cmpf oeq, %0, %40 : vector<16x128xf32>
    %cst_28 = arith.constant 9.000000e+00 : f32
    %42 = vector.broadcast %cst_28 : f32 to vector<16x128xf32>
    %43 = arith.cmpf oeq, %0, %42 : vector<16x128xf32>
    %cst_29 = arith.constant 1.000000e+01 : f32
    %44 = vector.broadcast %cst_29 : f32 to vector<16x128xf32>
    %45 = arith.cmpf oeq, %0, %44 : vector<16x128xf32>
    %cst_30 = arith.constant 1.100000e+01 : f32
    %46 = vector.broadcast %cst_30 : f32 to vector<16x128xf32>
    %47 = arith.cmpf oeq, %0, %46 : vector<16x128xf32>
    %48 = arith.ori %33, %41 : vector<16x128xi1>
    %49 = arith.ori %48, %47 : vector<16x128xi1>
    %50 = arith.ori %37, %43 : vector<16x128xi1>
    %51 = arith.ori %50, %45 : vector<16x128xi1>
    %52 = arith.ori %39, %45 : vector<16x128xi1>
    %53 = arith.ori %52, %47 : vector<16x128xi1>
    %54 = arith.ori %35, %41 : vector<16x128xi1>
    %55 = arith.ori %54, %43 : vector<16x128xi1>
    %cst_31 = arith.constant 0.000000e+00 : f32
    %56 = vector.broadcast %cst_31 : f32 to vector<16x128xf32>
    %57 = arith.cmpf oeq, %0, %56 : vector<16x128xf32>
    %cst_32 = arith.constant 4.000000e+00 : f32
    %58 = vector.broadcast %cst_32 : f32 to vector<16x128xf32>
    %59 = arith.cmpf oge, %0, %58 : vector<16x128xf32>
    %cst_33 = arith.constant 1.100000e+01 : f32
    %60 = vector.broadcast %cst_33 : f32 to vector<16x128xf32>
    %61 = arith.cmpf ole, %0, %60 : vector<16x128xf32>
    %62 = arith.andi %59, %61 : vector<16x128xi1>
    %63 = arith.ori %57, %62 : vector<16x128xi1>
    %cst_34 = arith.constant 0.000000e+00 : f32
    %64 = vector.broadcast %cst_34 : f32 to vector<16x128xf32>
    %65 = arith.select %63, %0, %64 : vector<16x128xi1>, vector<16x128xf32>
    %c0_35 = arith.constant 0 : index
    %c0_36 = arith.constant 0 : index
    %66 = vector.load %arg4[%c0_35, %c0_36] : memref<16x128xf32, #tpu.memory_space<vmem>>, vector<16x128xf32>
    tpu.vector_store %arg4[%c0_35, %c0_36], %65 {strides = array<i32>} : memref<16x128xf32, #tpu.memory_space<vmem>>, vector<16x128xf32>,
    %67 = tpu.iota {dimensions = array<i32: 1>} : vector<16x128xi32>
    %68 = tpu.iota {dimensions = array<i32: 0>} : vector<16x128xi32>
    %c0_i32 = arith.constant 0 : i32
    %69 = vector.broadcast %c0_i32 : i32 to vector<16x128xi32>
    %70 = arith.cmpi eq, %67, %69 : vector<16x128xi32>
    %c127_i32 = arith.constant 127 : i32
    %71 = vector.broadcast %c127_i32 : i32 to vector<16x128xi32>
    %72 = arith.cmpi eq, %67, %71 : vector<16x128xi32>
    %c0_i32_37 = arith.constant 0 : i32
    %73 = vector.broadcast %c0_i32_37 : i32 to vector<16x128xi32>
    %74 = arith.cmpi eq, %68, %73 : vector<16x128xi32>
    %c15_i32 = arith.constant 15 : i32
    %75 = vector.broadcast %c15_i32 : i32 to vector<16x128xi32>
    %76 = arith.cmpi eq, %68, %75 : vector<16x128xi32>
    %c1_i32 = arith.constant 1 : i32
    %77 = tpu.dynamic_rotate %22 by %c1_i32 dim 1 : vector<16x128xf32>, i32 -> vector<16x128xf32>
    %c127_i32_38 = arith.constant 127 : i32
    %78 = tpu.dynamic_rotate %22 by %c127_i32_38 dim 1 : vector<16x128xf32>, i32 -> vector<16x128xf32>
    %c1_i32_39 = arith.constant 1 : i32
    %79 = tpu.dynamic_rotate %22 by %c1_i32_39 dim 0 : vector<16x128xf32>, i32 -> vector<16x128xf32>
    %c15_i32_40 = arith.constant 15 : i32
    %80 = tpu.dynamic_rotate %22 by %c15_i32_40 dim 0 : vector<16x128xf32>, i32 -> vector<16x128xf32>
    %81 = arith.select %70, %78, %77 : vector<16x128xi1>, vector<16x128xf32>
    %82 = arith.select %72, %77, %78 : vector<16x128xi1>, vector<16x128xf32>
    %83 = arith.select %74, %80, %79 : vector<16x128xi1>, vector<16x128xf32>
    %84 = arith.select %76, %79, %80 : vector<16x128xi1>, vector<16x128xf32>
    %85 = arith.subf %82, %22 : vector<16x128xf32>
    %86 = arith.subf %22, %81 : vector<16x128xf32>
    %87 = arith.subf %82, %81 : vector<16x128xf32>
    %cst_41 = arith.constant 5.000000e-01 : f32
    %88 = vector.broadcast %cst_41 : f32 to vector<16x128xf32>
    %89 = arith.mulf %88, %87 : vector<16x128xf32>
    %90 = arith.select %51, %86, %89 : vector<16x128xi1>, vector<16x128xf32>
    %91 = arith.select %49, %85, %90 : vector<16x128xi1>, vector<16x128xf32>
    %92 = arith.subf %83, %22 : vector<16x128xf32>
    %93 = arith.subf %22, %84 : vector<16x128xf32>
    %94 = arith.subf %84, %83 : vector<16x128xf32>
    %cst_42 = arith.constant 5.000000e-01 : f32
    %95 = vector.broadcast %cst_42 : f32 to vector<16x128xf32>
    %96 = arith.mulf %95, %94 : vector<16x128xf32>
    %97 = arith.select %55, %93, %96 : vector<16x128xi1>, vector<16x128xf32>
    %98 = arith.select %53, %92, %97 : vector<16x128xi1>, vector<16x128xf32>
    %c1_i32_43 = arith.constant 1 : i32
    %99 = tpu.dynamic_rotate %16 by %c1_i32_43 dim 1 : vector<16x128xf32>, i32 -> vector<16x128xf32>
    %c127_i32_44 = arith.constant 127 : i32
    %100 = tpu.dynamic_rotate %16 by %c127_i32_44 dim 1 : vector<16x128xf32>, i32 -> vector<16x128xf32>
    %c1_i32_45 = arith.constant 1 : i32
    %101 = tpu.dynamic_rotate %16 by %c1_i32_45 dim 0 : vector<16x128xf32>, i32 -> vector<16x128xf32>
    %c15_i32_46 = arith.constant 15 : i32
    %102 = tpu.dynamic_rotate %16 by %c15_i32_46 dim 0 : vector<16x128xf32>, i32 -> vector<16x128xf32>
    %103 = arith.select %70, %100, %99 : vector<16x128xi1>, vector<16x128xf32>
    %104 = arith.select %72, %99, %100 : vector<16x128xi1>, vector<16x128xf32>
    %105 = arith.select %74, %102, %101 : vector<16x128xi1>, vector<16x128xf32>
    %106 = arith.select %76, %101, %102 : vector<16x128xi1>, vector<16x128xf32>
    %107 = arith.subf %104, %103 : vector<16x128xf32>
    %cst_47 = arith.constant 5.000000e-01 : f32
    %108 = vector.broadcast %cst_47 : f32 to vector<16x128xf32>
    %109 = arith.mulf %108, %107 : vector<16x128xf32>
    %110 = arith.subf %106, %105 : vector<16x128xf32>
    %cst_48 = arith.constant 5.000000e-01 : f32
    %111 = vector.broadcast %cst_48 : f32 to vector<16x128xf32>
    %112 = arith.mulf %111, %110 : vector<16x128xf32>
    %113 = arith.addf %103, %104 : vector<16x128xf32>
    %114 = arith.addf %113, %105 : vector<16x128xf32>
    %115 = arith.addf %114, %106 : vector<16x128xf32>
    %cst_49 = arith.constant 4.000000e+00 : f32
    %116 = vector.broadcast %cst_49 : f32 to vector<16x128xf32>
    %117 = arith.mulf %116, %16 : vector<16x128xf32>
    %118 = arith.subf %115, %117 : vector<16x128xf32>
    %119 = arith.mulf %16, %109 : vector<16x128xf32>
    %120 = arith.mulf %19, %112 : vector<16x128xf32>
    %121 = arith.addf %119, %120 : vector<16x128xf32>
    %122 = arith.addf %121, %91 : vector<16x128xf32>
    %cst_50 = arith.constant 21.333334 : f32
    %123 = vector.broadcast %cst_50 : f32 to vector<16x128xf32>
    %124 = arith.mulf %123, %122 : vector<16x128xf32>
    %cst_51 = arith.constant 22.7555561 : f32
    %125 = vector.broadcast %cst_51 : f32 to vector<16x128xf32>
    %126 = arith.mulf %125, %118 : vector<16x128xf32>
    %127 = arith.subf %124, %126 : vector<16x128xf32>
    %128 = arith.mulf %127, %127 : vector<16x128xf32>
    %c1_i32_52 = arith.constant 1 : i32
    %129 = tpu.dynamic_rotate %19 by %c1_i32_52 dim 1 : vector<16x128xf32>, i32 -> vector<16x128xf32>
    %c127_i32_53 = arith.constant 127 : i32
    %130 = tpu.dynamic_rotate %19 by %c127_i32_53 dim 1 : vector<16x128xf32>, i32 -> vector<16x128xf32>
    %c1_i32_54 = arith.constant 1 : i32
    %131 = tpu.dynamic_rotate %19 by %c1_i32_54 dim 0 : vector<16x128xf32>, i32 -> vector<16x128xf32>
    %c15_i32_55 = arith.constant 15 : i32
    %132 = tpu.dynamic_rotate %19 by %c15_i32_55 dim 0 : vector<16x128xf32>, i32 -> vector<16x128xf32>
    %133 = arith.select %70, %130, %129 : vector<16x128xi1>, vector<16x128xf32>
    %134 = arith.select %72, %129, %130 : vector<16x128xi1>, vector<16x128xf32>
    %135 = arith.select %74, %132, %131 : vector<16x128xi1>, vector<16x128xf32>
    %136 = arith.select %76, %131, %132 : vector<16x128xi1>, vector<16x128xf32>
    %137 = arith.subf %134, %133 : vector<16x128xf32>
    %cst_56 = arith.constant 5.000000e-01 : f32
    %138 = vector.broadcast %cst_56 : f32 to vector<16x128xf32>
    %139 = arith.mulf %138, %137 : vector<16x128xf32>
    %140 = arith.subf %136, %135 : vector<16x128xf32>
    %cst_57 = arith.constant 5.000000e-01 : f32
    %141 = vector.broadcast %cst_57 : f32 to vector<16x128xf32>
    %142 = arith.mulf %141, %140 : vector<16x128xf32>
    %143 = arith.addf %133, %134 : vector<16x128xf32>
    %144 = arith.addf %143, %135 : vector<16x128xf32>
    %145 = arith.addf %144, %136 : vector<16x128xf32>
    %cst_58 = arith.constant 4.000000e+00 : f32
    %146 = vector.broadcast %cst_58 : f32 to vector<16x128xf32>
    %147 = arith.mulf %146, %19 : vector<16x128xf32>
    %148 = arith.subf %145, %147 : vector<16x128xf32>
    %149 = arith.mulf %16, %139 : vector<16x128xf32>
    %150 = arith.mulf %19, %142 : vector<16x128xf32>
    %151 = arith.addf %149, %150 : vector<16x128xf32>
    %152 = arith.addf %151, %98 : vector<16x128xf32>
    %cst_59 = arith.constant 21.333334 : f32
    %153 = vector.broadcast %cst_59 : f32 to vector<16x128xf32>
    %154 = arith.mulf %153, %152 : vector<16x128xf32>
    %cst_60 = arith.constant 22.7555561 : f32
    %155 = vector.broadcast %cst_60 : f32 to vector<16x128xf32>
    %156 = arith.mulf %155, %148 : vector<16x128xf32>
    %157 = arith.subf %154, %156 : vector<16x128xf32>
    %158 = arith.mulf %157, %157 : vector<16x128xf32>
    %159 = arith.addf %128, %158 : vector<16x128xf32>
    %160 = arith.addf %109, %142 : vector<16x128xf32>
    %cst_61 = arith.constant 21.333334 : f32
    %161 = vector.broadcast %cst_61 : f32 to vector<16x128xf32>
    %162 = arith.mulf %161, %160 : vector<16x128xf32>
    %163 = arith.mulf %162, %162 : vector<16x128xf32>
    %164 = arith.addf %159, %163 : vector<16x128xf32>
    %cst_62 = arith.constant 0.000000e+00 : f32
    %165 = vector.broadcast %cst_62 : f32 to vector<16x128xf32>
    %166 = arith.select %63, %164, %165 : vector<16x128xi1>, vector<16x128xf32>
    %167 = vector.shape_cast %166 : vector<16x128xf32> to vector<1x16x128xf32>
    %cst_63 = arith.constant dense<0.000000e+00> : vector<1xf32>
    %168 = vector.multi_reduction <add>, %167, %cst_63 [1, 2] : vector<1x16x128xf32> to vector<1xf32>
    %169 = vector.shape_cast %168 : vector<1xf32> to vector<1x1x1xf32>
    %170 = vector.extract %169[0, 0, 0] : f32 from vector<1x1x1xf32>
    %cst_64 = arith.constant 4.8828125E-4 : f32
    %171 = arith.mulf %170, %cst_64 : f32
    %c0_65 = arith.constant 0 : index
    %c0_66 = arith.constant 0 : index
    %172 = memref.load %arg2[%c0_65, %c0_66] : memref<1x1xf32, #tpu.memory_space<smem>>
    memref.store %171, %arg2[%c0_65, %c0_66] : memref<1x1xf32, #tpu.memory_space<smem>>
    return
  }
}

</mosaic_0001>

<llo_original>
// kernel: tpu_custom_call.1
$region0: #{tpu_custom_call.1}
  #allocation0 [shape = 'u32[]', space=smem, size = 0x4, offset = 0x4, fixed_abs, tag = 'smem constant byte address 0x4 - core index']
  #allocation1 [shape = 'u32[72,128]{1,0:T(1,128)}', space=vmem, size = 0x9000, scoped, tag = 'internal scratch']
  %s0 = inlined_call_operand.hbm [shape: f32[16,128], index: 0, kind: input, shape index: {}]
  %s1 = inlined_call_operand.hbm [shape: f32[3,16,128], index: 1, kind: input, shape index: {}]
  %s2 = inlined_call_operand.hbm [shape: f32[1,1], index: 2, kind: output, shape index: {0}]
  %s3 = inlined_call_operand.hbm [shape: f32[3,16,128], index: 3, kind: output, shape index: {1}]
  %s4 = inlined_call_operand.hbm [shape: f32[16,128], index: 4, kind: output, shape index: {2}]
  %5 = xla_tuple %s2, %s3, %s4
  %s6 = sld [smem:[#allocation0]]
  $region42: #{tpu_custom_call.1} parent=0
    _
  %s8 = ssub.s32 1, %s6
  %s9 = scalar_select 0, %s8, %s6
  $region1: #{tpu_custom_call.1} parent=0
    #allocation2 [shape = 'u8[8192]{0}', space=vmem, size = 0x2000, scoped, tag = 'input window, operand 0, single buffered']
    #allocation3 [shape = 's32[1]{0}', space=sflag, size = 0x4, scoped, tag = 'scoped memory for tpu_custom_call.1']
    #allocation4 [shape = 's32[1]{0}', space=sflag, size = 0x4, scoped, tag = 'scoped memory for tpu_custom_call.1']
    #allocation5 [shape = 's32[1]{0}', space=sflag, size = 0x4, scoped, tag = 'scoped memory for tpu_custom_call.1']
    #allocation6 [shape = 'u8[24576]{0}', space=vmem, size = 0x6000, scoped, tag = 'input window, operand 1, single buffered']
    #allocation7 [shape = 's32[1]{0}', space=sflag, size = 0x4, scoped, tag = 'scoped memory for tpu_custom_call.1']
    #allocation8 [shape = 'u8[512]{0}', space=smem, size = 0x200, scoped, tag = 'output window, operand 0, single buffered']
    #allocation9 [shape = 'u8[24576]{0}', space=vmem, size = 0x6000, scoped, tag = 'output window, operand 1, single buffered']
    #allocation10 [shape = 'u8[8192]{0}', space=vmem, size = 0x2000, scoped, tag = 'output window, operand 2, single buffered']
    #allocation11 [shape = 's32[1]{0}', space=sflag, size = 0x4, scoped, tag = 'scoped memory for tpu_custom_call.1']
    %10 = vsyncpa [#allocation3], 0
    %11 = vsyncpa [#allocation7], 0
    %12 = vsyncpa [#allocation5], 0
    %13 = vsyncpa [#allocation4], 0
    %14 = vsyncpa [#allocation11], 0
    // Predicated region
    $region2: #{tpu_custom_call.1} parent=1 // pred_check
      _
    $region3: #{tpu_custom_call.1} parent=1 // pred_check_branch
      %16 = sbr.rel (0) target = $region5
    $region4: #{tpu_custom_call.1} parent=1 // pred_region
      %18 = vsyncadd [#allocation3], 0
      %s19 = sshll.u32 %s0, 4
      %s20 = int_to_ptr.hbm [resolvable:$true] %s19
      %s21 = sshll.u32 [#allocation2], 4
      %s22 = int_to_ptr.vmem [resolvable:$true] %s21
      %27 = dma.hbm_to_vmem [thread:$0]  %s20, 256, %s22, [#allocation3], 128, 128, 8
    $region5: #{tpu_custom_call.1} parent=1 // pred_fallthru
      _
    // Predicated region
    $region6: #{tpu_custom_call.1} parent=1 // pred_check
      _
    $region7: #{tpu_custom_call.1} parent=1 // pred_check_branch
      %29 = sbr.rel (0) target = $region9
    $region8: #{tpu_custom_call.1} parent=1 // pred_region
      %31 = vsyncadd [#allocation7], 0
      %s32 = sshll.u32 %s1, 4
      %s33 = int_to_ptr.hbm [resolvable:$true] %s32
      %s34 = sshll.u32 [#allocation6], 4
      %s35 = int_to_ptr.vmem [resolvable:$true] %s34
      %40 = dma.hbm_to_vmem [thread:$0]  %s33, 768, %s35, [#allocation7], 128, 128, 8
    $region9: #{tpu_custom_call.1} parent=1 // pred_fallthru
      _
    // Predicated region
    $region10: #{tpu_custom_call.1} parent=1 // pred_check
      _
    $region11: #{tpu_custom_call.1} parent=1 // pred_check_branch
      %42 = sbr.rel (0) target = $region13
    $region12: #{tpu_custom_call.1} parent=1 // pred_region
      %44 = dma.done [#allocation3], 256
    $region13: #{tpu_custom_call.1} parent=1 // pred_fallthru
      _
    // Predicated region
    $region14: #{tpu_custom_call.1} parent=1 // pred_check
      _
    $region15: #{tpu_custom_call.1} parent=1 // pred_check_branch
      %46 = sbr.rel (0) target = $region17
    $region16: #{tpu_custom_call.1} parent=1 // pred_region
      %48 = dma.done [#allocation7], 768
    $region17: #{tpu_custom_call.1} parent=1 // pred_fallthru
      _
    %v49 = vld [vmem:[#allocation2] sm:$0xff]
    %v50 = vld [vmem:[#allocation2 + $0x8] sm:$0xff]
    %v51 = vld [vmem:[#allocation6] sm:$0xff]
    %v52 = vld [vmem:[#allocation6 + $0x8] sm:$0xff]
    %s53 = scalar_lea.vmem [#allocation6], 16
    %v54 = vld [vmem:[%s53] sm:$0xff]
    %v55 = vld [vmem:[%s53 + $0x8] sm:$0xff]
    %s56 = scalar_lea.vmem [#allocation6], 32
    %v57 = vld [vmem:[%s56] sm:$0xff]
    %v58 = vld [vmem:[%s56 + $0x8] sm:$0xff]
    %vm59 = vcmp.eq.f32.partialorder %v49, 1.0
    %vm60 = vcmp.eq.f32.partialorder %v50, 1.0
    %vm61 = vcmp.eq.f32.partialorder %v49, 2.0
    %vm62 = vcmp.eq.f32.partialorder %v50, 2.0
    %vm63 = vcmp.eq.f32.partialorder %v49, 3.0
    %vm64 = vcmp.eq.f32.partialorder %v50, 3.0
    %v65 = vsel %vm59, 3.0, %v51
    %v66 = vsel %vm60, 3.0, %v52
    %v67 = vsel %vm61, 0.0, %v65
    %v68 = vsel %vm62, 0.0, %v66
    %vm69 = vmor %vm59, %vm61
    %vm70 = vmor %vm60, %vm62
    %v71 = vsel %vm69, 0.0, %v54
    %v72 = vsel %vm70, 0.0, %v55
    %vm73 = vmor %vm61, %vm63
    %vm74 = vmor %vm62, %vm64
    %v75 = vsel %vm73, 0.0, %v57
    %v76 = vsel %vm74, 0.0, %v58
    %77 = vst [vmem:[#allocation9] sm:$0xff] %v67
    %78 = vst [vmem:[#allocation9 + $0x8] sm:$0xff] %v68
    %s79 = scalar_lea.vmem [#allocation9], 16
    %80 = vst [vmem:[%s79] sm:$0xff] %v71
    %81 = vst [vmem:[%s79 + $0x8] sm:$0xff] %v72
    %s82 = scalar_lea.vmem [#allocation9], 32
    %83 = vst [vmem:[%s82] sm:$0xff] %v75
    %84 = vst [vmem:[%s82 + $0x8] sm:$0xff] %v76
    %vm85 = vcmp.eq.f32.partialorder %v49, 4.0
    %vm86 = vcmp.eq.f32.partialorder %v50, 4.0
    %vm87 = vcmp.eq.f32.partialorder %v49, 5.0
    %vm88 = vcmp.eq.f32.partialorder %v50, 5.0
    %vm89 = vcmp.eq.f32.partialorder %v49, 6.0
    %vm90 = vcmp.eq.f32.partialorder %v50, 6.0
    %vm91 = vcmp.eq.f32.partialorder %v49, 7.0
    %vm92 = vcmp.eq.f32.partialorder %v50, 7.0
    %vm93 = vcmp.eq.f32.partialorder %v49, 8.0
    %vm94 = vcmp.eq.f32.partialorder %v50, 8.0
    %vm95 = vcmp.eq.f32.partialorder %v49, 9.0
    %vm96 = vcmp.eq.f32.partialorder %v50, 9.0
    %vm97 = vcmp.eq.f32.partialorder %v49, 10.0
    %vm98 = vcmp.eq.f32.partialorder %v50, 10.0
    %vm99 = vcmp.eq.f32.partialorder %v49, 11.0
    %vm100 = vcmp.eq.f32.partialorder %v50, 11.0
    %vm101 = vmor %vm85, %vm93
    %vm102 = vmor %vm86, %vm94
    %vm103 = vmor %vm101, %vm99
    %vm104 = vmor %vm102, %vm100
    %vm105 = vmor %vm89, %vm95
    %vm106 = vmor %vm90, %vm96
    %vm107 = vmor %vm105, %vm97
    %vm108 = vmor %vm106, %vm98
    %vm109 = vmor %vm91, %vm97
    %vm110 = vmor %vm92, %vm98
    %vm111 = vmor %vm109, %vm99
    %vm112 = vmor %vm110, %vm100
    %vm113 = vmor %vm87, %vm93
    %vm114 = vmor %vm88, %vm94
    %vm115 = vmor %vm113, %vm95
    %vm116 = vmor %vm114, %vm96
    %vm117 = vcmp.eq.f32.partialorder %v49, 0.0
    %vm118 = vcmp.eq.f32.partialorder %v50, 0.0
    %vm119 = vcmp.ge.f32.partialorder %v49, 4.0
    %vm120 = vcmp.ge.f32.partialorder %v50, 4.0
    %vm121 = vcmp.le.f32.partialorder %v49, 11.0
    %vm122 = vcmp.le.f32.partialorder %v50, 11.0
    %vm123 = vmand %vm119, %vm121
    %vm124 = vmand %vm120, %vm122
    %vm125 = vmor %vm117, %vm123
    %vm126 = vmor %vm118, %vm124
    %v127 = vsel %vm125, %v49, 0.0
    %v128 = vsel %vm126, %v50, 0.0
    %129 = vst [vmem:[#allocation10] sm:$0xff] %v127
    %130 = vst [vmem:[#allocation10 + $0x8] sm:$0xff] %v128
    %v131 = vlaneseq
    %v132 = vand.u32 %v131, 127
    %v133 = vlaneseq
    %v134 = vshrl.u32 %v133, 7
    %v135 = vadd.s32 %v134, 8
    %vm136 = vcmp.eq.s32.totalorder %v132, 0
    %vm137 = vcmp.eq.s32.totalorder %v132, 127
    %vm138 = vcmp.eq.s32.totalorder %v134, 0
    %vm139 = vcmp.eq.s32.totalorder %v135, 0
    %vm140 = vcmp.eq.s32.totalorder %v134, 15
    %vm141 = vcmp.eq.s32.totalorder %v135, 15
    %142 = vrot.lane.b32.xlu0 %v75, 1
    %v143 = vpop.permute.xlu0 %142
    %144 = vrot.lane.b32.xlu0 %v76, 1
    %v145 = vpop.permute.xlu0 %144
    %146 = vrot.lane.b32.xlu0 %v75, 127
    %v147 = vpop.permute.xlu0 %146
    %148 = vrot.lane.b32.xlu0 %v76, 127
    %v149 = vpop.permute.xlu0 %148
    %v150 = vrot.slane %v75, 7
    %v151 = vrot.slane %v76, 7
    %vm152 = vcmp.lt.s32.totalorder %v134, 1
    %v153 = vsel %vm152, %v150, %v151
    %v154 = vsel %vm152, %v151, %v150
    %v155 = vrot.slane %v75, 1
    %v156 = vrot.slane %v76, 1
    %vm157 = vcmp.lt.s32.totalorder %v134, 7
    %v158 = vsel %vm157, %v155, %v156
    %v159 = vsel %vm157, %v156, %v155
    %v160 = vsel %vm136, %v147, %v143
    %v161 = vsel %vm136, %v149, %v145
    %v162 = vsel %vm137, %v143, %v147
    %v163 = vsel %vm137, %v145, %v149
    %v164 = vsel %vm138, %v158, %v154
    %v165 = vsel %vm139, %v159, %v153
    %v166 = vsel %vm140, %v154, %v158
    %v167 = vsel %vm141, %v153, %v159
    %v168 = vsub.f32 %v162, %v75
    %v169 = vsub.f32 %v163, %v76
    %v170 = vsub.f32 %v75, %v160
    %v171 = vsub.f32 %v76, %v161
    %v172 = vsub.f32 %v162, %v160
    %v173 = vsub.f32 %v163, %v161
    %v174 = vmul.f32 %v172, 0.5
    %v175 = vmul.f32 %v173, 0.5
    %v176 = vsel %vm107, %v170, %v174
    %v177 = vsel %vm108, %v171, %v175
    %v178 = vsel %vm103, %v168, %v176
    %v179 = vsel %vm104, %v169, %v177
    %v180 = vsub.f32 %v164, %v75
    %v181 = vsub.f32 %v165, %v76
    %v182 = vsub.f32 %v75, %v166
    %v183 = vsub.f32 %v76, %v167
    %v184 = vsub.f32 %v166, %v164
    %v185 = vsub.f32 %v167, %v165
    %v186 = vmul.f32 %v184, 0.5
    %v187 = vmul.f32 %v185, 0.5
    %v188 = vsel %vm115, %v182, %v186
    %v189 = vsel %vm116, %v183, %v187
    %v190 = vsel %vm111, %v180, %v188
    %v191 = vsel %vm112, %v181, %v189
    %192 = vrot.lane.b32.xlu0 %v67, 1
    %v193 = vpop.permute.xlu0 %192
    %194 = vrot.lane.b32.xlu0 %v68, 1
    %v195 = vpop.permute.xlu0 %194
    %196 = vrot.lane.b32.xlu0 %v67, 127
    %v197 = vpop.permute.xlu0 %196
    %198 = vrot.lane.b32.xlu0 %v68, 127
    %v199 = vpop.permute.xlu0 %198
    %v200 = vrot.slane %v67, 7
    %v201 = vrot.slane %v68, 7
    %v202 = vsel %vm152, %v200, %v201
    %v203 = vsel %vm152, %v201, %v200
    %v204 = vrot.slane %v67, 1
    %v205 = vrot.slane %v68, 1
    %v206 = vsel %vm157, %v204, %v205
    %v207 = vsel %vm157, %v205, %v204
    %v208 = vsel %vm136, %v197, %v193
    %v209 = vsel %vm136, %v199, %v195
    %v210 = vsel %vm137, %v193, %v197
    %v211 = vsel %vm137, %v195, %v199
    %v212 = vsel %vm138, %v206, %v203
    %v213 = vsel %vm139, %v207, %v202
    %v214 = vsel %vm140, %v203, %v206
    %v215 = vsel %vm141, %v202, %v207
    %v216 = vsub.f32 %v210, %v208
    %v217 = vsub.f32 %v211, %v209
    %v218 = vmul.f32 %v216, 0.5
    %v219 = vmul.f32 %v217, 0.5
    %v220 = vsub.f32 %v214, %v212
    %v221 = vsub.f32 %v215, %v213
    %v222 = vmul.f32 %v220, 0.5
    %v223 = vmul.f32 %v221, 0.5
    %v224 = vadd.f32 %v208, %v210
    %v225 = vadd.f32 %v209, %v211
    %v226 = vadd.f32 %v224, %v212
    %v227 = vadd.f32 %v225, %v213
    %v228 = vadd.f32 %v226, %v214
    %v229 = vadd.f32 %v227, %v215
    %v230 = vmul.f32 %v67, 4.0
    %v231 = vmul.f32 %v68, 4.0
    %v232 = vsub.f32 %v228, %v230
    %v233 = vsub.f32 %v229, %v231
    %v234 = vmul.f32 %v67, %v218
    %v235 = vmul.f32 %v68, %v219
    %v236 = vmul.f32 %v71, %v222
    %v237 = vmul.f32 %v72, %v223
    %v238 = vadd.f32 %v234, %v236
    %v239 = vadd.f32 %v235, %v237
    %v240 = vadd.f32 %v238, %v178
    %v241 = vadd.f32 %v239, %v179
    %v242 = vmul.f32 %v240, 21.333334
    %v243 = vmul.f32 %v241, 21.333334
    %v244 = vmul.f32 %v232, 22.755556
    %v245 = vmul.f32 %v233, 22.755556
    %v246 = vsub.f32 %v242, %v244
    %v247 = vsub.f32 %v243, %v245
    %v248 = vmul.f32 %v246, %v246
    %v249 = vmul.f32 %v247, %v247
    %250 = vrot.lane.b32.xlu0 %v71, 1
    %v251 = vpop.permute.xlu0 %250
    %252 = vrot.lane.b32.xlu0 %v72, 1
    %v253 = vpop.permute.xlu0 %252
    %254 = vrot.lane.b32.xlu0 %v71, 127
    %v255 = vpop.permute.xlu0 %254
    %256 = vrot.lane.b32.xlu0 %v72, 127
    %v257 = vpop.permute.xlu0 %256
    %v258 = vrot.slane %v71, 7
    %v259 = vrot.slane %v72, 7
    %v260 = vsel %vm152, %v258, %v259
    %v261 = vsel %vm152, %v259, %v258
    %v262 = vrot.slane %v71, 1
    %v263 = vrot.slane %v72, 1
    %v264 = vsel %vm157, %v262, %v263
    %v265 = vsel %vm157, %v263, %v262
    %v266 = vsel %vm136, %v255, %v251
    %v267 = vsel %vm136, %v257, %v253
    %v268 = vsel %vm137, %v251, %v255
    %v269 = vsel %vm137, %v253, %v257
    %v270 = vsel %vm138, %v264, %v261
    %v271 = vsel %vm139, %v265, %v260
    %v272 = vsel %vm140, %v261, %v264
    %v273 = vsel %vm141, %v260, %v265
    %v274 = vsub.f32 %v268, %v266
    %v275 = vsub.f32 %v269, %v267
    %v276 = vmul.f32 %v274, 0.5
    %v277 = vmul.f32 %v275, 0.5
    %v278 = vsub.f32 %v272, %v270
    %v279 = vsub.f32 %v273, %v271
    %v280 = vmul.f32 %v278, 0.5
    %v281 = vmul.f32 %v279, 0.5
    %v282 = vadd.f32 %v266, %v268
    %v283 = vadd.f32 %v267, %v269
    %v284 = vadd.f32 %v282, %v270
    %v285 = vadd.f32 %v283, %v271
    %v286 = vadd.f32 %v284, %v272
    %v287 = vadd.f32 %v285, %v273
    %v288 = vmul.f32 %v71, 4.0
    %v289 = vmul.f32 %v72, 4.0
    %v290 = vsub.f32 %v286, %v288
    %v291 = vsub.f32 %v287, %v289
    %v292 = vmul.f32 %v67, %v276
    %v293 = vmul.f32 %v68, %v277
    %v294 = vmul.f32 %v71, %v280
    %v295 = vmul.f32 %v72, %v281
    %v296 = vadd.f32 %v292, %v294
    %v297 = vadd.f32 %v293, %v295
    %v298 = vadd.f32 %v296, %v190
    %v299 = vadd.f32 %v297, %v191
    %v300 = vmul.f32 %v298, 21.333334
    %v301 = vmul.f32 %v299, 21.333334
    %v302 = vmul.f32 %v290, 22.755556
    %v303 = vmul.f32 %v291, 22.755556
    %v304 = vsub.f32 %v300, %v302
    %v305 = vsub.f32 %v301, %v303
    %v306 = vmul.f32 %v304, %v304
    %v307 = vmul.f32 %v305, %v305
    %v308 = vadd.f32 %v248, %v306
    %v309 = vadd.f32 %v249, %v307
    %v310 = vadd.f32 %v218, %v280
    %v311 = vadd.f32 %v219, %v281
    %v312 = vmul.f32 %v310, 21.333334
    %v313 = vmul.f32 %v311, 21.333334
    %v314 = vmul.f32 %v312, %v312
    %v315 = vmul.f32 %v313, %v313
    %v316 = vadd.f32 %v308, %v314
    %v317 = vadd.f32 %v309, %v315
    %v318 = vsel %vm125, %v316, 0.0
    %v319 = vsel %vm126, %v317, 0.0
    %v320 = vadd.f32 %v318, %v319
    %321 = vadd.xlane.f32.xlu0 %v320
    %v322 = vpop.xlane.xlu0 %321
    %v323 = vrot.slane %v322, 4
    %v324 = vadd.f32 %v322, %v323
    %v325 = vrot.slane %v324, 2
    %v326 = vadd.f32 %v324, %v325
    %v327 = vrot.slane %v326, 1
    %v328 = vadd.f32 %v326, %v327
    %s329 = vtos %v328
    %s330 = smul.f32 %s329, 0.00048828125
    %s331 = scalar_lea.smem [#allocation8], 0
    %332 = sst [smem:[%s331]] %s330
    // Predicated region
    $region18: #{tpu_custom_call.1} parent=1 // pred_check
      _
    $region19: #{tpu_custom_call.1} parent=1 // pred_check_branch
      %334 = sbr.rel (0) target = $region21
    $region20: #{tpu_custom_call.1} parent=1 // pred_region
      %336 = vsyncadd [#allocation5], 0
      %s338 = sshll.u32 %s2, 4
      %s339 = int_to_ptr.hbm [resolvable:$true] %s338
      %341 = dma.smem_to_hbm [#allocation8], 16, %s339, [#allocation5]
    $region21: #{tpu_custom_call.1} parent=1 // pred_fallthru
      _
    // Predicated region
    $region22: #{tpu_custom_call.1} parent=1 // pred_check
      _
    $region23: #{tpu_custom_call.1} parent=1 // pred_check_branch
      %343 = sbr.rel (0) target = $region25
    $region24: #{tpu_custom_call.1} parent=1 // pred_region
      %345 = vsyncadd [#allocation4], 0
      %s346 = sshll.u32 [#allocation9], 4
      %s347 = int_to_ptr.vmem [resolvable:$true] %s346
      %s348 = sshll.u32 %s3, 4
      %s349 = int_to_ptr.hbm [resolvable:$true] %s348
      %354 = dma.vmem_to_hbm [thread:$0]  %s347, 768, %s349, [#allocation4], 128, 128, 8
    $region25: #{tpu_custom_call.1} parent=1 // pred_fallthru
      _
    // Predicated region
    $region26: #{tpu_custom_call.1} parent=1 // pred_check
      _
    $region27: #{tpu_custom_call.1} parent=1 // pred_check_branch
      %356 = sbr.rel (0) target = $region29
    $region28: #{tpu_custom_call.1} parent=1 // pred_region
      %358 = vsyncadd [#allocation11], 0
      %s359 = sshll.u32 [#allocation10], 4
      %s360 = int_to_ptr.vmem [resolvable:$true] %s359
      %s361 = sshll.u32 %s4, 4
      %s362 = int_to_ptr.hbm [resolvable:$true] %s361
      %367 = dma.vmem_to_hbm [thread:$0]  %s360, 256, %s362, [#allocation11], 128, 128, 8
    $region29: #{tpu_custom_call.1} parent=1 // pred_fallthru
      _
    // Predicated region
    $region30: #{tpu_custom_call.1} parent=1 // pred_check
      _
    $region31: #{tpu_custom_call.1} parent=1 // pred_check_branch
      %369 = sbr.rel (0) target = $region33
    $region32: #{tpu_custom_call.1} parent=1 // pred_region
      %371 = dma.done [#allocation5], 16
    $region33: #{tpu_custom_call.1} parent=1 // pred_fallthru
      _
    // Predicated region
    $region34: #{tpu_custom_call.1} parent=1 // pred_check
      _
    $region35: #{tpu_custom_call.1} parent=1 // pred_check_branch
      %373 = sbr.rel (0) target = $region37
    $region36: #{tpu_custom_call.1} parent=1 // pred_region
      %375 = dma.done [#allocation4], 768
    $region37: #{tpu_custom_call.1} parent=1 // pred_fallthru
      _
    // Predicated region
    $region38: #{tpu_custom_call.1} parent=1 // pred_check
      _
    $region39: #{tpu_custom_call.1} parent=1 // pred_check_branch
      %377 = sbr.rel (0) target = $region41
    $region40: #{tpu_custom_call.1} parent=1 // pred_region
      %379 = dma.done [#allocation11], 256
    $region41: #{tpu_custom_call.1} parent=1 // pred_fallthru
      _
    %380 = sfence
    %381 = vsyncpa [#allocation3], 1
    %382 = vsyncpa [#allocation7], 1
    %383 = vsyncpa [#allocation4], 1
    %384 = vsyncpa [#allocation11], 1
    %385 = vsyncpa [#allocation5], 1

</llo_original>
